<compile_context>
chip_gen: v7x
topology: tpu7x:2x2x1
jax: 0.10.0
libtpu: 0.0.40
codegen_flags: <defaults>
</compile_context>

<pallas_src>
import functools
import math

import jax
import jax.numpy as jnp
from jax import lax
from jax.experimental import pallas as pl
from jax.experimental.pallas import tpu as pltpu


_MAX_TILE_BYTES = 2 * 1024 * 1024   # cap per-output tile (f32 bytes)
_MAX_WIDTH = 1024                   # cap on packed lane width (f32 elements)


def _rope_kernel(invf_ref, phase_ref, cos_ref, sin_ref, *, pack):
    # cos_ref / sin_ref: (ts, width) with width = pack * half.
    # Packed element (i, j) holds the logical table entry for
    #   position = pack * i_global + j // half,  freq idx = j % half
    # invf_ref[0, j]  = inv_freq[j % half]
    # phase_ref[0, j] = (j // half) * inv_freq[j % half]
    ts, width = cos_ref.shape
    base_pos = pl.program_id(0) * (ts * pack)                  # int32 scalar

    row = lax.broadcasted_iota(jnp.int32, (ts, 1), 0)          # (ts, 1)
    row_pos = (base_pos + row * pack).astype(jnp.float32)      # exact for pos < 2^24

    # outer(t, inv_freq) in packed layout, via two cheap broadcasts.
    freqs = row_pos * invf_ref[...] + phase_ref[...]           # (ts, width) f32
    cos_ref[...] = jnp.cos(freqs)
    sin_ref[...] = jnp.sin(freqs)


def _choose_pack(half: int) -> int:
    # Smallest pack with pack*half a multiple of 128 (lane-dense stores).
    pack = 128 // math.gcd(half, 128)
    if pack * half > _MAX_WIDTH:
        pack = 1                    # rare odd head dims; fall back to masked stores
    return pack


def _choose_tiling(rows: int, width: int, tile_rows: int):
    """Pick (tile_size, padded_rows). Grid = padded_rows // tile_size."""
    max_tile_rows = max(8, ((_MAX_TILE_BYTES // (width * 4)) // 8) * 8)
    tile_rows = max(8, min(tile_rows, max_tile_rows))
    if rows <= 8:
        return rows, rows                            # tiny full-extent block
    if rows <= 16:
        ts = -(-rows // 8) * 8
        return ts, ts                                # single sublane-aligned tile
    # Even number of tiles >= 2 so v7x's two TensorCores both get work.
    ntiles = max(2, -(-rows // tile_rows))
    if ntiles % 2:
        ntiles += 1
    ts = -(-rows // ntiles)
    ts = -(-ts // 8) * 8                             # sublane-align
    return ts, ntiles * ts


def rope_pallas(dim: int, seq_len: int, *, tile_rows: int = 2048):
    """Return (cos, sin), each (seq_len, dim // 2) float32 — RoPE.forward tables."""
    assert dim % 2 == 0 and seq_len >= 1
    half = dim // 2

    pack = _choose_pack(half)
    width = pack * half
    rows = -(-seq_len // pack)                       # packed rows needed
    ts, rows_padded = _choose_tiling(rows, width, tile_rows)
    grid = (rows_padded // ts,)

    # Per-lane constants, computed once with the exact reference formulation.
    inv_freq = 1.0 / (10000.0 ** (jnp.arange(0, dim, 2, dtype=jnp.float32) / dim))
    invf_row = jnp.tile(inv_freq, pack).reshape(1, width)               # (1, width)
    phase_row = (jnp.arange(pack, dtype=jnp.float32)[:, None]
                 * inv_freq[None, :]).reshape(1, width)                 # (1, width)

    const_spec = pl.BlockSpec((1, width), lambda i: (0, 0))
    out_spec = pl.BlockSpec((ts, width), lambda i: (i, 0))
    out_shape = (
        jax.ShapeDtypeStruct((rows_padded, width), jnp.float32),
        jax.ShapeDtypeStruct((rows_padded, width), jnp.float32),
    )

    cos_p, sin_p = pl.pallas_call(
        functools.partial(_rope_kernel, pack=pack),
        out_shape=out_shape,
        grid=grid,
        in_specs=[const_spec, const_spec],
        out_specs=(out_spec, out_spec),
        compiler_params=pltpu.CompilerParams(
            dimension_semantics=("parallel",)),
    )(invf_row, phase_row)

    # Packed (rows_padded, pack*half) row-major == (rows_padded*pack, half)
    # row-major: the reshape is free. Only slice when padding was required.
    total = rows_padded * pack
    cos = cos_p.reshape(total, half)
    sin = sin_p.reshape(total, half)
    if total != seq_len:
        cos = cos[:seq_len]
        sin = sin[:seq_len]
    return cos, sin


def _ref_tables(dim, seq_len):
    inv_freq = 1.0 / (10000.0 ** (jnp.arange(0, dim, 2, dtype=jnp.float32) / dim))
    freqs = jnp.outer(jnp.arange(seq_len, dtype=jnp.float32), inv_freq)
    return jnp.cos(freqs), jnp.sin(freqs)


if __name__ == "__main__":
    # Shapes implied by the module: activations x: (B, H, S, dim). forward()
    # only uses x for device/dtype placement; the tables depend on (dim, seq_len).
    dim, seq_len = 64, 8
    batch, heads = 2, 4
    key = jax.random.PRNGKey(0)
    x = jax.random.normal(key, (batch, heads, seq_len, dim), dtype=jnp.float32)  # placement only

    # 1) Module-sized case (single tiny tile, pack=4).
    cos, sin = rope_pallas(dim, seq_len)
    jax.block_until_ready((cos, sin))
    rc, rs = _ref_tables(dim, seq_len)
    assert cos.shape == (seq_len, dim // 2) and sin.shape == (seq_len, dim // 2)
    assert jnp.allclose(cos, rc, atol=1e-5) and jnp.allclose(sin, rs, atol=1e-5)

    # 2) Non-power-of-two head dim exercises the lcm lane packing (half=48,
    #    pack=8, width=384) and the padded-trim path (seq not multiple of pack).
    cos2, sin2 = rope_pallas(96, 100)
    jax.block_until_ready((cos2, sin2))
    rc2, rs2 = _ref_tables(96, 100)
    assert cos2.shape == (100, 48)
    assert jnp.allclose(cos2, rc2, atol=1e-4) and jnp.allclose(sin2, rs2, atol=1e-4)

    # 3) Production-ish length: half=64, pack=2, rows=2048 -> grid=2 tiles of
    #    1024 packed rows (even grid for v7x's 2 TCs), no padding, no trim.
    #    Looser tolerance: at position ~4e3 the angle magnitude amplifies
    #    last-ulp rounding differences in the packed-phase formulation.
    cos3, sin3 = rope_pallas(128, 4096)
    jax.block_until_ready((cos3, sin3))
    rc3, rs3 = _ref_tables(128, 4096)
    assert cos3.shape == (4096, 64) and sin3.shape == (4096, 64)
    assert jnp.allclose(cos3, rc3, atol=5e-3) and jnp.allclose(sin3, rs3, atol=5e-3)

    print("KERNEL_OK")
</pallas_src>

<mosaic_0001>
module attributes {stable_mosaic.version = 11 : i64} {
  func.func @_rope_kernel(%arg0: i32, %arg1: memref<1x128xf32, #tpu.memory_space<vmem>>, %arg2: memref<1x128xf32, #tpu.memory_space<vmem>>, %arg3: memref<2x128xf32, #tpu.memory_space<vmem>>, %arg4: memref<2x128xf32, #tpu.memory_space<vmem>>) attributes {dimension_semantics = [#tpu.dimension_semantics<parallel>], iteration_bounds = array<i64: 1>, scalar_prefetch = 0 : i64, scratch_operands = 0 : i64, tpu.core_type = #tpu.core_type<tc>, window_params = [{pipeline_mode = #tpu.pipeline_mode<synchronous>, transform_indices = @transform_0, window_bounds = array<i64: 1, 128>}, {pipeline_mode = #tpu.pipeline_mode<synchronous>, transform_indices = @transform_1, window_bounds = array<i64: 1, 128>}, {transform_indices = @transform_2, window_bounds = array<i64: 2, 128>}, {transform_indices = @transform_3, window_bounds = array<i64: 2, 128>}]} {
    %c8_i32 = arith.constant 8 : i32
    %0 = arith.muli %arg0, %c8_i32 : i32
    %1 = tpu.iota {dimensions = array<i32: 0>} : vector<2x1xi32>
    %c4_i32 = arith.constant 4 : i32
    %2 = vector.broadcast %c4_i32 : i32 to vector<2x1xi32>
    %3 = arith.muli %1, %2 : vector<2x1xi32>
    %4 = vector.broadcast %0 : i32 to vector<2x1xi32>
    %5 = arith.addi %4, %3 : vector<2x1xi32>
    %6 = arith.sitofp %5 : vector<2x1xi32> to vector<2x1xf32>
    %c0 = arith.constant 0 : index
    %c0_0 = arith.constant 0 : index
    %7 = vector.load %arg1[%c0, %c0_0] : memref<1x128xf32, #tpu.memory_space<vmem>>, vector<1x128xf32>
    %8 = vector.broadcast %6 : vector<2x1xf32> to vector<2x128xf32>
    %9 = vector.broadcast %7 : vector<1x128xf32> to vector<2x128xf32>
    %10 = arith.mulf %8, %9 : vector<2x128xf32>
    %c0_1 = arith.constant 0 : index
    %c0_2 = arith.constant 0 : index
    %11 = vector.load %arg2[%c0_1, %c0_2] : memref<1x128xf32, #tpu.memory_space<vmem>>, vector<1x128xf32>
    %12 = vector.broadcast %11 : vector<1x128xf32> to vector<2x128xf32>
    %13 = arith.addf %10, %12 : vector<2x128xf32>
    %14 = math.cos %13 : vector<2x128xf32>
    %c0_3 = arith.constant 0 : index
    %c0_4 = arith.constant 0 : index
    %15 = vector.load %arg3[%c0_3, %c0_4] : memref<2x128xf32, #tpu.memory_space<vmem>>, vector<2x128xf32>
    tpu.vector_store %arg3[%c0_3, %c0_4], %14 {strides = array<i32>} : memref<2x128xf32, #tpu.memory_space<vmem>>, vector<2x128xf32>,
    %16 = math.sin %13 : vector<2x128xf32>
    %c0_5 = arith.constant 0 : index
    %c0_6 = arith.constant 0 : index
    %17 = vector.load %arg4[%c0_5, %c0_6] : memref<2x128xf32, #tpu.memory_space<vmem>>, vector<2x128xf32>
    tpu.vector_store %arg4[%c0_5, %c0_6], %16 {strides = array<i32>} : memref<2x128xf32, #tpu.memory_space<vmem>>, vector<2x128xf32>,
    return
  }
  func.func @transform_0(%arg0: i32) -> (i32, i32) {
    %c0_i32 = arith.constant 0 : i32
    %c0_i32_0 = arith.constant 0 : i32
    %c0_i32_1 = arith.constant 0 : i32
    return %c0_i32, %c0_i32_0 : i32, i32
  }
  func.func @transform_1(%arg0: i32) -> (i32, i32) {
    %c0_i32 = arith.constant 0 : i32
    %c0_i32_0 = arith.constant 0 : i32
    %c0_i32_1 = arith.constant 0 : i32
    return %c0_i32, %c0_i32_0 : i32, i32
  }
  func.func @transform_2(%arg0: i32) -> (i32, i32) {
    %c0_i32 = arith.constant 0 : i32
    %c0_i32_0 = arith.constant 0 : i32
    return %arg0, %c0_i32 : i32, i32
  }
  func.func @transform_3(%arg0: i32) -> (i32, i32) {
    %c0_i32 = arith.constant 0 : i32
    %c0_i32_0 = arith.constant 0 : i32
    return %arg0, %c0_i32 : i32, i32
  }
}

</mosaic_0001>

<llo_original>
// kernel: tpu_custom_call.1
$region0: #{tpu_custom_call.1}
  #allocation0 [shape = 'u32[]', space=smem, size = 0x4, offset = 0x4, fixed_abs, tag = 'smem constant byte address 0x4 - core index']
  #allocation1 [shape = 'u32[144,128]{1,0:T(1,128)}', space=vmem, size = 0x12000, scoped, tag = 'internal scratch']
  %s0 = inlined_call_operand.hbm [shape: f32[1,128], index: 0, kind: input, shape index: {}]
  %s1 = inlined_call_operand.vmem [shape: f32[1,128], index: 1, kind: input, shape index: {}]
  %s2 = inlined_call_operand.hbm [shape: f32[2,128], index: 2, kind: output, shape index: {0}]
  %s3 = inlined_call_operand.hbm [shape: f32[2,128], index: 3, kind: output, shape index: {1}]
  %4 = xla_tuple %s2, %s3
  %s5 = sld [smem:[#allocation0]]
  $region30: #{tpu_custom_call.1} parent=0
    _
  %s7 = ssub.s32 1, %s5
  %s8 = scalar_select 0, %s7, %s5
  $region1: #{tpu_custom_call.1} parent=0
    #allocation2 [shape = 'u8[512]{0}', space=vmem, size = 0x400, scoped, tag = 'input window, operand 0, single buffered']
    #allocation3 [shape = 's32[1]{0}', space=sflag, size = 0x4, scoped, tag = 'scoped memory for tpu_custom_call.1']
    #allocation4 [shape = 's32[1]{0}', space=sflag, size = 0x4, scoped, tag = 'scoped memory for tpu_custom_call.1']
    #allocation5 [shape = 'u8[1024]{0}', space=vmem, size = 0x400, scoped, tag = 'output window, operand 0, single buffered']
    #allocation6 [shape = 'u8[1024]{0}', space=vmem, size = 0x400, scoped, tag = 'output window, operand 1, single buffered']
    #allocation7 [shape = 's32[1]{0}', space=sflag, size = 0x4, scoped, tag = 'scoped memory for tpu_custom_call.1']
    %9 = vsyncpa [#allocation3], 0
    %10 = vsyncpa [#allocation4], 0
    %11 = vsyncpa [#allocation7], 0
    // Predicated region
    $region2: #{tpu_custom_call.1} parent=1 // pred_check
      _
    $region3: #{tpu_custom_call.1} parent=1 // pred_check_branch
      %13 = sbr.rel (0) target = $region5
    $region4: #{tpu_custom_call.1} parent=1 // pred_region
      %s15 = ssub.s32 16, 16
      %16 = vsyncadd [#allocation3], %s15
      %s18 = sshll.u32 [#allocation2], 4
      %s19 = int_to_ptr.vmem [resolvable:$true] %s18
      %21 = dma.hbm_to_vmem [thread:$0]  %s0, 16, %s19, [#allocation3]
    $region5: #{tpu_custom_call.1} parent=1 // pred_fallthru
      _
    // Predicated region
    $region6: #{tpu_custom_call.1} parent=1 // pred_check
      _
    $region7: #{tpu_custom_call.1} parent=1 // pred_check_branch
      %23 = sbr.rel (0) target = $region9
    $region8: #{tpu_custom_call.1} parent=1 // pred_region
      _
    $region9: #{tpu_custom_call.1} parent=1 // pred_fallthru
      _
    // Predicated region
    $region10: #{tpu_custom_call.1} parent=1 // pred_check
      _
    $region11: #{tpu_custom_call.1} parent=1 // pred_check_branch
      %25 = sbr.rel (0) target = $region13
    $region12: #{tpu_custom_call.1} parent=1 // pred_region
      %26 = dma.done [#allocation3], 16
    $region13: #{tpu_custom_call.1} parent=1 // pred_fallthru
      _
    %s27 = smul.u32 0, 8
    %v28 = vlaneseq
    %v29 = vshrl.u32 %v28, 7
    %v30 = vmul.u32 %v29, 4
    %v31 = vstv %s27
    %v32 = vadd.s32 %v31, %v30
    %v33 = vcvt.s32.f32 %v32
    %v34 = vld [vmem:[#allocation2] sm:$0x1]
    %v36 = vlaneseq
    %v37 = vshrl.u32 %v36, 7
    %v38 = vsub.s32 0, %v37
    %v39 = vrot.slane %v34, %v38
    %v41 = vmul.f32 %v33, %v39
    %v42 = vld [vmem:[%s1] sm:$0x1]
    %v44 = vlaneseq
    %v45 = vshrl.u32 %v44, 7
    %v46 = vsub.s32 0, %v45
    %v47 = vrot.slane %v42, %v46
    %v49 = vadd.f32 %v41, %v47
    %v50 = vand.u32 2147483647, %v49
    %vm51 = vcmp.le.f32.partialorder %v50, 0.7853982
    %vm52 = vcmp.lt.s32.totalorder %v49, 0
    %v53 = vand.u32 %v49, 2139095040
    %v54 = vshrl.u32 %v53, 23
    %v55 = vsub.s32 %v54, 127
    %v56 = vand.u32 2147483647, %v49
    %v57 = vand.u32 %v56, 8388607
    %v58 = vor.u32 %v57, 8388608
    %v59 = vsub.s32 0, %v58
    %v60 = vadd.s32 %v55, 1
    %vm61 = vcmp.gt.s32.totalorder %v60, 0
    %v62 = vsel %vm61, %v60, 0
    %v63 = vshrl.u32 %v62, 5
    %v64 = vand.u32 %v62, 31
    %v65 = vsub.s32 32, %v64
    %v66 = vshrl.u32 683565275, %v65
    %v67 = vshll.u32 683565275, %v64
    %v68 = vshrl.u32 2475754826, %v65
    %v69 = vor.u32 %v67, %v68
    %v70 = vshll.u32 2475754826, %v64
    %v71 = vshrl.u32 2131351028, %v65
    %v72 = vor.u32 %v70, %v71
    %v73 = vshll.u32 2131351028, %v64
    %v74 = vshrl.u32 2102212464, %v65
    %v75 = vor.u32 %v73, %v74
    %v76 = vshll.u32 2102212464, %v64
    %v77 = vshrl.u32 920167782, %v65
    %v78 = vor.u32 %v76, %v77
    %v79 = vshll.u32 920167782, %v64
    %v80 = vshrl.u32 1326507024, %v65
    %v81 = vor.u32 %v79, %v80
    %vm82 = vcmp.lt.s32.totalorder %v63, 1
    %vm83 = vcmp.lt.s32.totalorder %v63, 2
    %vm84 = vcmp.lt.s32.totalorder %v63, 3
    %vm85 = vcmp.lt.s32.totalorder %v63, 4
    %v86 = vsel %vm82, %v66, %v69
    %v87 = vsel %vm85, %v75, 2102212464
    %v88 = vsel %vm84, %v72, %v87
    %v89 = vsel %vm83, %v86, %v88
    %v90 = vsel %vm82, %v69, %v72
    %v91 = vsel %vm85, %v78, 920167782
    %v92 = vsel %vm84, %v75, %v91
    %v93 = vsel %vm83, %v90, %v92
    %v94 = vsel %vm82, %v72, %v75
    %v95 = vsel %vm85, %v81, 1326507024
    %v96 = vsel %vm84, %v78, %v95
    %v97 = vsel %vm83, %v94, %v96
    %v98 = vshll.u32 %v58, 8
    %v99 = vmul.u32.u64.compose %v98, %v97
    %v100 = vextract.low.u32 %v99
    %v101 = vextract.high.u32 %v99
    %v102 = vmul.u32.u64.compose %v98, %v93
    %v103 = vextract.low.u32 %v102
    %v104 = vextract.high.u32 %v102
    %v105 = vmul.u32 %v98, %v89
    %v106 = vadd.s32 %v101, %v103
    %vm107 = vc.u32 %v101, %v103
    %v108 = vadd.s32 %v104, 1
    %v109 = vsel %vm107, %v108, %v104
    %v110 = vadd.s32 %v105, %v109
    %v111 = vadd.s32 %v110, 536870912
    %v112 = vshrl.u32 %v111, 30
    %v113 = vshll.u32 %v112, 30
    %v114 = vsub.s32 %v110, %v113
    %vm115 = vcmp.lt.s32.totalorder %v114, 0
    %v116 = vsub.s32 0, %v114
    %v117 = vsel %vm115, %v116, %v114
    %v118 = vclz %v117
    %v119 = vsub.s32 %v118, 2
    %vm120 = vcmp.gt.s32.totalorder 0, %v119
    %v121 = vsel %vm120, 0, %v119
    %v122 = vsub.s32 32, %v121
    %v123 = vshll.u32 %v114, %v121
    %v124 = vshrl.u32 %v106, %v122
    %v125 = vor.u32 %v123, %v124
    %v126 = vsub.s32 4294967266, %v121
    %v127 = vadd.s32 %v126, 127
    %v128 = vshll.u32 %v127, 23
    %v129 = vor.u32 4788187, %v128
    %v130 = vand.u32 2147483647, %v129
    %v132 = vcvt.s32.f32 %v125
    %v133 = vmul.f32 %v132, %v130
    %v134 = vxor.u32 %v133, 2147483648
    %v135 = vsel %vm52, %v134, %v133
    %v136 = vsub.s32 4, %v112
    %v137 = vsel %vm52, %v136, %v112
    %v138 = vsel %vm51, %v49, %v135
    %v139 = vsel %vm51, 0, %v137
    %v140 = vcosq.f32.pop %v138
    %v141 = vsinq.f32.pop %v138
    %vm142 = vweird.f32 %v49
    %v143 = vand.u32 %v139, 3
    %vm144 = vcmp.lt.s32.totalorder %v143, 2
    %vm145 = vcmp.eq.s32.totalorder %v143, 0
    %v146 = vxor.u32 %v141, 2147483648
    %v147 = vsel %vm145, %v140, %v146
    %vm148 = vcmp.eq.s32.totalorder %v143, 2
    %v149 = vxor.u32 %v140, 2147483648
    %v150 = vsel %vm148, %v149, %v141
    %v151 = vsel %vm144, %v147, %v150
    %v152 = vsel %vm142, nan, %v151
    %153 = vst [vmem:[#allocation5] sm:$0x3] %v152
    %v154 = vand.u32 2147483647, %v49
    %vm155 = vcmp.le.f32.partialorder %v154, 0.7853982
    %vm156 = vcmp.lt.s32.totalorder %v49, 0
    %v157 = vand.u32 %v49, 2139095040
    %v158 = vshrl.u32 %v157, 23
    %v159 = vsub.s32 %v158, 127
    %v160 = vand.u32 2147483647, %v49
    %v161 = vand.u32 %v160, 8388607
    %v162 = vor.u32 %v161, 8388608
    %v163 = vsub.s32 0, %v162
    %v164 = vadd.s32 %v159, 1
    %vm165 = vcmp.gt.s32.totalorder %v164, 0
    %v166 = vsel %vm165, %v164, 0
    %v167 = vshrl.u32 %v166, 5
    %v168 = vand.u32 %v166, 31
    %v169 = vsub.s32 32, %v168
    %v170 = vshrl.u32 683565275, %v169
    %v171 = vshll.u32 683565275, %v168
    %v172 = vshrl.u32 2475754826, %v169
    %v173 = vor.u32 %v171, %v172
    %v174 = vshll.u32 2475754826, %v168
    %v175 = vshrl.u32 2131351028, %v169
    %v176 = vor.u32 %v174, %v175
    %v177 = vshll.u32 2131351028, %v168
    %v178 = vshrl.u32 2102212464, %v169
    %v179 = vor.u32 %v177, %v178
    %v180 = vshll.u32 2102212464, %v168
    %v181 = vshrl.u32 920167782, %v169
    %v182 = vor.u32 %v180, %v181
    %v183 = vshll.u32 920167782, %v168
    %v184 = vshrl.u32 1326507024, %v169
    %v185 = vor.u32 %v183, %v184
    %vm186 = vcmp.lt.s32.totalorder %v167, 1
    %vm187 = vcmp.lt.s32.totalorder %v167, 2
    %vm188 = vcmp.lt.s32.totalorder %v167, 3
    %vm189 = vcmp.lt.s32.totalorder %v167, 4
    %v190 = vsel %vm186, %v170, %v173
    %v191 = vsel %vm189, %v179, 2102212464
    %v192 = vsel %vm188, %v176, %v191
    %v193 = vsel %vm187, %v190, %v192
    %v194 = vsel %vm186, %v173, %v176
    %v195 = vsel %vm189, %v182, 920167782
    %v196 = vsel %vm188, %v179, %v195
    %v197 = vsel %vm187, %v194, %v196
    %v198 = vsel %vm186, %v176, %v179
    %v199 = vsel %vm189, %v185, 1326507024
    %v200 = vsel %vm188, %v182, %v199
    %v201 = vsel %vm187, %v198, %v200
    %v202 = vshll.u32 %v162, 8
    %v203 = vmul.u32.u64.compose %v202, %v201
    %v204 = vextract.low.u32 %v203
    %v205 = vextract.high.u32 %v203
    %v206 = vmul.u32.u64.compose %v202, %v197
    %v207 = vextract.low.u32 %v206
    %v208 = vextract.high.u32 %v206
    %v209 = vmul.u32 %v202, %v193
    %v210 = vadd.s32 %v205, %v207
    %vm211 = vc.u32 %v205, %v207
    %v212 = vadd.s32 %v208, 1
    %v213 = vsel %vm211, %v212, %v208
    %v214 = vadd.s32 %v209, %v213
    %v215 = vadd.s32 %v214, 536870912
    %v216 = vshrl.u32 %v215, 30
    %v217 = vshll.u32 %v216, 30
    %v218 = vsub.s32 %v214, %v217
    %vm219 = vcmp.lt.s32.totalorder %v218, 0
    %v220 = vsub.s32 0, %v218
    %v221 = vsel %vm219, %v220, %v218
    %v222 = vclz %v221
    %v223 = vsub.s32 %v222, 2
    %vm224 = vcmp.gt.s32.totalorder 0, %v223
    %v225 = vsel %vm224, 0, %v223
    %v226 = vsub.s32 32, %v225
    %v227 = vshll.u32 %v218, %v225
    %v228 = vshrl.u32 %v210, %v226
    %v229 = vor.u32 %v227, %v228
    %v230 = vsub.s32 4294967266, %v225
    %v231 = vadd.s32 %v230, 127
    %v232 = vshll.u32 %v231, 23
    %v233 = vor.u32 4788187, %v232
    %v234 = vand.u32 2147483647, %v233
    %v236 = vcvt.s32.f32 %v229
    %v237 = vmul.f32 %v236, %v234
    %v238 = vxor.u32 %v237, 2147483648
    %v239 = vsel %vm156, %v238, %v237
    %v240 = vsub.s32 4, %v216
    %v241 = vsel %vm156, %v240, %v216
    %v242 = vsel %vm155, %v49, %v239
    %v243 = vsel %vm155, 0, %v241
    %v244 = vcosq.f32.pop %v242
    %v245 = vsinq.f32.pop %v242
    %vm246 = vweird.f32 %v49
    %v247 = vadd.s32 %v243, 3
    %v248 = vand.u32 %v247, 3
    %vm249 = vcmp.lt.s32.totalorder %v248, 2
    %vm250 = vcmp.eq.s32.totalorder %v248, 0
    %v251 = vxor.u32 %v245, 2147483648
    %v252 = vsel %vm250, %v244, %v251
    %vm253 = vcmp.eq.s32.totalorder %v248, 2
    %v254 = vxor.u32 %v244, 2147483648
    %v255 = vsel %vm253, %v254, %v245
    %v256 = vsel %vm249, %v252, %v255
    %v257 = vsel %vm246, nan, %v256
    %258 = vst [vmem:[#allocation6] sm:$0x3] %v257
    // Predicated region
    $region14: #{tpu_custom_call.1} parent=1 // pred_check
      _
    $region15: #{tpu_custom_call.1} parent=1 // pred_check_branch
      %260 = sbr.rel (0) target = $region17
    $region16: #{tpu_custom_call.1} parent=1 // pred_region
      %s262 = ssub.s32 32, 32
      %263 = vsyncadd [#allocation4], %s262
      %s265 = sshll.u32 [#allocation5], 4
      %s266 = int_to_ptr.vmem [resolvable:$true] %s265
      %268 = dma.vmem_to_hbm [thread:$0]  %s266, 32, %s2, [#allocation4]
    $region17: #{tpu_custom_call.1} parent=1 // pred_fallthru
      _
    // Predicated region
    $region18: #{tpu_custom_call.1} parent=1 // pred_check
      _
    $region19: #{tpu_custom_call.1} parent=1 // pred_check_branch
      %270 = sbr.rel (0) target = $region21
    $region20: #{tpu_custom_call.1} parent=1 // pred_region
      %s272 = ssub.s32 32, 32
      %273 = vsyncadd [#allocation7], %s272
      %s275 = sshll.u32 [#allocation6], 4
      %s276 = int_to_ptr.vmem [resolvable:$true] %s275
      %278 = dma.vmem_to_hbm [thread:$0]  %s276, 32, %s3, [#allocation7]
    $region21: #{tpu_custom_call.1} parent=1 // pred_fallthru
      _
    // Predicated region
    $region22: #{tpu_custom_call.1} parent=1 // pred_check
      _
    $region23: #{tpu_custom_call.1} parent=1 // pred_check_branch
      %280 = sbr.rel (0) target = $region25
    $region24: #{tpu_custom_call.1} parent=1 // pred_region
      %281 = dma.done [#allocation4], 32
    $region25: #{tpu_custom_call.1} parent=1 // pred_fallthru
      _
    // Predicated region
    $region26: #{tpu_custom_call.1} parent=1 // pred_check
      _
    $region27: #{tpu_custom_call.1} parent=1 // pred_check_branch
      %283 = sbr.rel (0) target = $region29
    $region28: #{tpu_custom_call.1} parent=1 // pred_region
      %284 = dma.done [#allocation7], 32
    $region29: #{tpu_custom_call.1} parent=1 // pred_fallthru
      _
    %285 = vsyncpa [#allocation3], 1
    %286 = vsyncpa [#allocation4], 1
    %287 = vsyncpa [#allocation7], 1

</llo_original>
